<compile_context>
chip_gen: v7x
topology: tpu7x:2x2x1
jax: 0.10.0
libtpu: 0.0.40
codegen_flags: <defaults>
</compile_context>

<pallas_src>
import functools

import jax
import jax.numpy as jnp
from jax.experimental import pallas as pl
from jax.experimental.pallas import tpu as pltpu

IGNORE_INDEX = -100


def _xent_rows_kernel(labels_ref, logits_ref, loss_ref, valid_ref):
    """One (TR, V) logits tile -> per-row (loss, valid) columns of shape (TR, 1)."""
    logits = logits_ref[...].astype(jnp.float32)           # (TR, V)
    labels = labels_ref[...]                                # (TR, 1) int32

    # Numerically stable logsumexp per row.
    m = jnp.max(logits, axis=-1, keepdims=True)             # (TR, 1)
    lse = jnp.log(jnp.sum(jnp.exp(logits - m), axis=-1, keepdims=True)) + m

    # Logit at the label position: one compare + select + row-sum (no onehot cast/mul).
    col = jax.lax.broadcasted_iota(jnp.int32, logits.shape, 1)
    label_logit = jnp.sum(jnp.where(col == labels, logits, 0.0),
                          axis=-1, keepdims=True)            # (TR, 1)

    # Rows past T-2 (causal shift) and edge-block padding carry label == IGNORE_INDEX.
    # jnp.where (not multiply-by-mask) also squashes NaN/Inf coming from the
    # unspecified values of padded logits rows.
    valid = labels != IGNORE_INDEX                           # (TR, 1) bool
    loss_ref[...] = jnp.where(valid, lse - label_logit, 0.0)
    valid_ref[...] = valid.astype(jnp.float32)


def _round_up(x, m):
    return ((x + m - 1) // m) * m


def _choose_tile_rows(n_rows, vocab, itemsize):
    # ~8 MiB per logits input buffer (double-buffered -> ~16 MiB): well past the
    # measured HBM-roofline knee, comfortably inside v7x's 64 MiB physical VMEM.
    budget = 8 * 1024 * 1024
    tr = budget // max(1, vocab * itemsize)
    tr = int(min(1024, max(16, tr)))
    tr -= tr % 16                          # bf16 packs 16 sublanes per vreg
    tr = min(tr, _round_up(max(n_rows, 1), 16))   # don't over-pad short sequences
    return max(tr, 16)


@functools.partial(jax.jit, static_argnames=("tile_rows",))
def gpt_lm_loss(logits, labels, *, tile_rows=None):
    """logits: (B, T, V) float (f32/bf16); labels: (B, T) int. Returns scalar f32 loss.

    Matches torch.nn.CrossEntropyLoss()(logits[..., :-1, :].reshape(-1, V),
                                        labels[..., 1:].reshape(-1)):
    mean over rows whose label != -100 (NaN if every row is ignored, same as torch).
    """
    B, T, V = logits.shape
    n_rows = T - 1                                          # rows after the shift
    tr = tile_rows or _choose_tile_rows(n_rows, V, logits.dtype.itemsize)
    num_tiles = int(pl.cdiv(n_rows, tr))
    t_pad = num_tiles * tr

    # Labels are tiny: shift + pad them host-side (padding rows -> ignore_index).
    # Logits are left untouched in HBM; the shift lives in the grid / index_map.
    shift_labels = labels[:, 1:].astype(jnp.int32)          # (B, T-1)
    if t_pad != n_rows:
        shift_labels = jnp.pad(shift_labels, ((0, 0), (0, t_pad - n_rows)),
                               constant_values=IGNORE_INDEX)
    labels_col = shift_labels.reshape(B * t_pad, 1)         # column layout per tile

    row_col_shape = jax.ShapeDtypeStruct((B * t_pad, 1), jnp.float32)
    row_col_spec = pl.BlockSpec((tr, 1), lambda b, r: (b * num_tiles + r, 0))

    loss_rows, valid_rows = pl.pallas_call(
        _xent_rows_kernel,
        out_shape=(row_col_shape, row_col_shape),
        grid_spec=pltpu.PrefetchScalarGridSpec(
            num_scalar_prefetch=0,
            grid=(B, num_tiles),
            in_specs=[
                row_col_spec,                                          # labels
                pl.BlockSpec((None, tr, V), lambda b, r: (b, r, 0)),   # logits
            ],
            out_specs=[row_col_spec, row_col_spec],
        ),
        compiler_params=pltpu.CompilerParams(
            dimension_semantics=("parallel", "parallel"),
            vmem_limit_bytes=48 * 1024 * 1024,
        ),
    )(labels_col, logits)

    # Final reduction in plain JAX: cheap (B * t_pad floats), keeps the grid fully
    # parallel (megacore on v7x) and avoids a long serial f32 accumulation.
    return jnp.sum(loss_rows) / jnp.sum(valid_rows)


def _reference_loss(logits, labels):
    """Pure-JAX reference matching torch.nn.CrossEntropyLoss (mean, ignore_index=-100)."""
    V = logits.shape[-1]
    sl = logits[:, :-1, :].reshape(-1, V).astype(jnp.float32)
    lb = labels[:, 1:].reshape(-1)
    logp = jax.nn.log_softmax(sl, axis=-1)
    valid = lb != IGNORE_INDEX
    safe = jnp.where(valid, lb, 0)
    nll = -jnp.take_along_axis(logp, safe[:, None], axis=-1)[:, 0]
    nll = jnp.where(valid, nll, 0.0)
    return jnp.sum(nll) / jnp.sum(valid.astype(jnp.float32))


if __name__ == "__main__":
    key = jax.random.PRNGKey(0)
    k1, k2 = jax.random.split(key)

    B, T, V = 2, 8, 32
    logits = jax.random.normal(k1, (B, T, V), dtype=jnp.float32)
    labels = jax.random.randint(k2, (B, T), 0, V, dtype=jnp.int32)

    loss = gpt_lm_loss(logits, labels)
    jax.block_until_ready(loss)

    ref = _reference_loss(logits, labels)
    assert jnp.allclose(loss, ref, atol=1e-5, rtol=1e-5), (loss, ref)

    print("KERNEL_OK")
</pallas_src>

<mosaic_0001>
module attributes {stable_mosaic.version = 11 : i64} {
  func.func @_xent_rows_kernel(%arg0: i32, %arg1: i32, %arg2: memref<16x1xi32, #tpu.memory_space<vmem>>, %arg3: memref<1x16x32xf32, #tpu.memory_space<vmem>>, %arg4: memref<16x1xf32, #tpu.memory_space<vmem>>, %arg5: memref<16x1xf32, #tpu.memory_space<vmem>>) attributes {dimension_semantics = [#tpu.dimension_semantics<parallel>, #tpu.dimension_semantics<parallel>], iteration_bounds = array<i64: 2, 1>, scalar_prefetch = 0 : i64, scratch_operands = 0 : i64, tpu.core_type = #tpu.core_type<tc>, window_params = [{transform_indices = @transform_0, window_bounds = array<i64: 16, 1>}, {transform_indices = @transform_1, window_bounds = array<i64: 1, 16, 32>}, {transform_indices = @transform_2, window_bounds = array<i64: 16, 1>}, {transform_indices = @transform_3, window_bounds = array<i64: 16, 1>}]} {
    %c0 = arith.constant 0 : index
    %c0_0 = arith.constant 0 : index
    %c0_1 = arith.constant 0 : index
    %0 = vector.load %arg3[%c0, %c0_0, %c0_1] : memref<1x16x32xf32, #tpu.memory_space<vmem>>, vector<1x16x32xf32>
    %1 = vector.shape_cast %0 : vector<1x16x32xf32> to vector<16x32xf32>
    %c0_2 = arith.constant 0 : index
    %c0_3 = arith.constant 0 : index
    %2 = vector.load %arg2[%c0_2, %c0_3] : memref<16x1xi32, #tpu.memory_space<vmem>>, vector<16x1xi32>
    %cst = arith.constant dense<0xFF800000> : vector<16xf32>
    %3 = vector.multi_reduction <maximumf>, %1, %cst [1] : vector<16x32xf32> to vector<16xf32>
    %4 = vector.shape_cast %3 : vector<16xf32> to vector<16x1xf32>
    %5 = vector.broadcast %4 : vector<16x1xf32> to vector<16x32xf32>
    %6 = arith.subf %1, %5 : vector<16x32xf32>
    %7 = math.exp %6 : vector<16x32xf32>
    %cst_4 = arith.constant dense<0.000000e+00> : vector<16xf32>
    %8 = vector.multi_reduction <add>, %7, %cst_4 [1] : vector<16x32xf32> to vector<16xf32>
    %9 = vector.shape_cast %8 : vector<16xf32> to vector<16x1xf32>
    %10 = math.log %9 : vector<16x1xf32>
    %11 = arith.addf %10, %4 : vector<16x1xf32>
    %12 = tpu.iota {dimensions = array<i32: 1>} : vector<16x32xi32>
    %13 = vector.broadcast %2 : vector<16x1xi32> to vector<16x32xi32>
    %14 = arith.cmpi eq, %12, %13 : vector<16x32xi32>
    %cst_5 = arith.constant 0.000000e+00 : f32
    %15 = vector.broadcast %cst_5 : f32 to vector<16x32xf32>
    %16 = arith.select %14, %1, %15 : vector<16x32xi1>, vector<16x32xf32>
    %cst_6 = arith.constant dense<0.000000e+00> : vector<16xf32>
    %17 = vector.multi_reduction <add>, %16, %cst_6 [1] : vector<16x32xf32> to vector<16xf32>
    %18 = vector.shape_cast %17 : vector<16xf32> to vector<16x1xf32>
    %c-100_i32 = arith.constant -100 : i32
    %19 = vector.broadcast %c-100_i32 : i32 to vector<16x1xi32>
    %20 = arith.cmpi ne, %2, %19 : vector<16x1xi32>
    %21 = arith.subf %11, %18 : vector<16x1xf32>
    %cst_7 = arith.constant 0.000000e+00 : f32
    %22 = vector.broadcast %cst_7 : f32 to vector<16x1xf32>
    %23 = arith.select %20, %21, %22 : vector<16x1xi1>, vector<16x1xf32>
    %c0_8 = arith.constant 0 : index
    %c0_9 = arith.constant 0 : index
    %24 = vector.load %arg4[%c0_8, %c0_9] : memref<16x1xf32, #tpu.memory_space<vmem>>, vector<16x1xf32>
    tpu.vector_store %arg4[%c0_8, %c0_9], %23 {strides = array<i32>} : memref<16x1xf32, #tpu.memory_space<vmem>>, vector<16x1xf32>,
    %25 = arith.extui %20 : vector<16x1xi1> to vector<16x1xi32>
    %26 = arith.sitofp %25 : vector<16x1xi32> to vector<16x1xf32>
    %c0_10 = arith.constant 0 : index
    %c0_11 = arith.constant 0 : index
    %27 = vector.load %arg5[%c0_10, %c0_11] : memref<16x1xf32, #tpu.memory_space<vmem>>, vector<16x1xf32>
    tpu.vector_store %arg5[%c0_10, %c0_11], %26 {strides = array<i32>} : memref<16x1xf32, #tpu.memory_space<vmem>>, vector<16x1xf32>,
    return
  }
  func.func @transform_0(%arg0: i32, %arg1: i32) -> (i32, i32) {
    %c1_i32 = arith.constant 1 : i32
    %0 = arith.muli %arg0, %c1_i32 : i32
    %1 = arith.addi %0, %arg1 : i32
    %c0_i32 = arith.constant 0 : i32
    %c0_i32_0 = arith.constant 0 : i32
    return %1, %c0_i32 : i32, i32
  }
  func.func @transform_1(%arg0: i32, %arg1: i32) -> (i32, i32, i32) {
    %c0_i32 = arith.constant 0 : i32
    %c0_i32_0 = arith.constant 0 : i32
    return %arg0, %arg1, %c0_i32 : i32, i32, i32
  }
  func.func @transform_2(%arg0: i32, %arg1: i32) -> (i32, i32) {
    %c1_i32 = arith.constant 1 : i32
    %0 = arith.muli %arg0, %c1_i32 : i32
    %1 = arith.addi %0, %arg1 : i32
    %c0_i32 = arith.constant 0 : i32
    %c0_i32_0 = arith.constant 0 : i32
    return %1, %c0_i32 : i32, i32
  }
  func.func @transform_3(%arg0: i32, %arg1: i32) -> (i32, i32) {
    %c1_i32 = arith.constant 1 : i32
    %0 = arith.muli %arg0, %c1_i32 : i32
    %1 = arith.addi %0, %arg1 : i32
    %c0_i32 = arith.constant 0 : i32
    %c0_i32_0 = arith.constant 0 : i32
    return %1, %c0_i32 : i32, i32
  }
}

</mosaic_0001>

<llo_original>
// kernel: gpt_lm_loss.1
$region0: #{gpt_lm_loss.1}
  #allocation0 [shape = 'u32[]', space=smem, size = 0x4, offset = 0x4, fixed_abs, tag = 'smem constant byte address 0x4 - core index']
  #allocation1 [shape = 'u32[144,128]{1,0:T(1,128)}', space=vmem, size = 0x12000, scoped, tag = 'internal scratch']
  %s0 = inlined_call_operand.vmem [shape: s32[32,1], index: 0, kind: input, shape index: {}]
  %s1 = inlined_call_operand.vmem [shape: f32[2,8,32], index: 1, kind: input, shape index: {}]
  %s2 = inlined_call_operand.vmem [shape: f32[32,1], index: 2, kind: output, shape index: {0}]
  %s3 = inlined_call_operand.vmem [shape: f32[32,1], index: 3, kind: output, shape index: {1}]
  %4 = xla_tuple %s2, %s3
  %s5 = sld [smem:[#allocation0]]
  $region49: #{gpt_lm_loss.1} parent=0
    _
  %s7 = ssub.s32 1, %s5
  %s8 = scalar_select 0, %s7, %s5
  loop: start=0, step=1, limit=4
  $region2: #{gpt_lm_loss.1} parent=0 // loop_pre_header
    _
  $region3: #{gpt_lm_loss.1} parent=0 // loop_header
    %s10 = sphi 0, %s14
    %p11 = scmp.ge.s32.totalorder %s10, 4
    %s17 = sphi 0, %s29
    %s18 = sphi 0, %s25
    %s19 = sphi 0, %s17
    %s20 = sphi 0, %s18
    %s21 = sphi 0, %s19
    %s22 = sphi 0, %s20
    %s34 = sphi 0, %s36
    %s37 = sphi 0, %s34
    %s38 = sphi 0, %s37
    %s54 = sphi 0, %s38
    %s62 = sphi 0, %s64
    %s65 = sphi 0, %s62
    %s66 = sphi 0, %s65
    %s82 = sphi 0, %s66
    %s90 = sphi 0, %s92
    %s93 = sphi 0, %s90
    %s94 = sphi 0, %s93
    %s110 = sphi 0, %s94
    %s118 = sphi 0, %s120
    %s121 = sphi 0, %s118
    %s122 = sphi 0, %s121
    %s138 = sphi 0, %s122
  $region4: #{gpt_lm_loss.1} parent=0 // loop_header_branch
    %13 = sbr.rel (%p11) target = $region8
  $region5: #{gpt_lm_loss.1} parent=0 // loop_body
    %s15 = ssub.s32 %s10, 1
    %s16 = ssub.s32 %s10, 2
    %s23 = sadd.s32 1, %s18
    %p24 = scmp.ge.s32.totalorder %s23, 1
    %s25 = scalar_select %p24, 0, %s23
    %s26 = sadd.s32 1, %s17
    %s27 = scalar_select %p24, %s26, %s17
    %p28 = scmp.ge.s32.totalorder %s27, 2
    %s29 = scalar_select %p28, 0, %s27
    %s30 = sadd.s32 %s17, %s18
    %s31 = sadd.s32 %s29, %s25
    %s32 = ssub.s32 %s30, %s31
    %p33 = scmp.eq.s32.totalorder %s32, 0
    %s35 = sadd.s32 %s34, 1
    %s36 = scalar_select %p33, %s34, %s35
    %p39 = pneg %p33
    %p40 = scmp.eq.s32.totalorder %s10, 1
    %p41 = por %p39, %p40
    %p42 = scmp.ne.s32.totalorder %s34, %s37
    %p43 = scmp.eq.s32.totalorder %s10, 0
    %p44 = por %p42, %p43
    %p45 = scmp.ne.s32.totalorder %s34, %s37
    %p46 = scmp.eq.s32.totalorder %s15, 1
    %p47 = por %p45, %p46
    %p48 = scmp.ne.s32.totalorder %s37, %s38
    %p49 = scmp.eq.s32.totalorder %s15, 0
    %p50 = por %p48, %p49
    %p51 = scmp.ne.s32.totalorder %s37, %s38
    %p52 = scmp.eq.s32.totalorder %s16, 1
    %p53 = por %p51, %p52
    %p55 = scmp.ne.s32.totalorder %s38, %s54
    %p56 = scmp.eq.s32.totalorder %s16, 0
    %p57 = por %p55, %p56
    %s58 = ssub.s32 %s17, %s29
    %s59 = ssub.s32 %s18, %s25
    %s60 = sor.u32 %s58, %s59
    %p61 = scmp.eq.s32.totalorder %s60, 0
    %s63 = sadd.s32 %s62, 1
    %s64 = scalar_select %p61, %s62, %s63
    %p67 = pneg %p61
    %p68 = scmp.eq.s32.totalorder %s10, 1
    %p69 = por %p67, %p68
    %p70 = scmp.ne.s32.totalorder %s62, %s65
    %p71 = scmp.eq.s32.totalorder %s10, 0
    %p72 = por %p70, %p71
    %p73 = scmp.ne.s32.totalorder %s62, %s65
    %p74 = scmp.eq.s32.totalorder %s15, 1
    %p75 = por %p73, %p74
    %p76 = scmp.ne.s32.totalorder %s65, %s66
    %p77 = scmp.eq.s32.totalorder %s15, 0
    %p78 = por %p76, %p77
    %p79 = scmp.ne.s32.totalorder %s65, %s66
    %p80 = scmp.eq.s32.totalorder %s16, 1
    %p81 = por %p79, %p80
    %p83 = scmp.ne.s32.totalorder %s66, %s82
    %p84 = scmp.eq.s32.totalorder %s16, 0
    %p85 = por %p83, %p84
    %s86 = sadd.s32 %s17, %s18
    %s87 = sadd.s32 %s29, %s25
    %s88 = ssub.s32 %s86, %s87
    %p89 = scmp.eq.s32.totalorder %s88, 0
    %s91 = sadd.s32 %s90, 1
    %s92 = scalar_select %p89, %s90, %s91
    %p95 = pneg %p89
    %p96 = scmp.eq.s32.totalorder %s10, 1
    %p97 = por %p95, %p96
    %p98 = scmp.ne.s32.totalorder %s90, %s93
    %p99 = scmp.eq.s32.totalorder %s10, 0
    %p100 = por %p98, %p99
    %p101 = scmp.ne.s32.totalorder %s90, %s93
    %p102 = scmp.eq.s32.totalorder %s15, 1
    %p103 = por %p101, %p102
    %p104 = scmp.ne.s32.totalorder %s93, %s94
    %p105 = scmp.eq.s32.totalorder %s15, 0
    %p106 = por %p104, %p105
    %p107 = scmp.ne.s32.totalorder %s93, %s94
    %p108 = scmp.eq.s32.totalorder %s16, 1
    %p109 = por %p107, %p108
    %p111 = scmp.ne.s32.totalorder %s94, %s110
    %p112 = scmp.eq.s32.totalorder %s16, 0
    %p113 = por %p111, %p112
    %s114 = sadd.s32 %s17, %s18
    %s115 = sadd.s32 %s29, %s25
    %s116 = ssub.s32 %s114, %s115
    %p117 = scmp.eq.s32.totalorder %s116, 0
    %s119 = sadd.s32 %s118, 1
    %s120 = scalar_select %p117, %s118, %s119
    %p123 = pneg %p117
    %p124 = scmp.eq.s32.totalorder %s10, 1
    %p125 = por %p123, %p124
    %p126 = scmp.ne.s32.totalorder %s118, %s121
    %p127 = scmp.eq.s32.totalorder %s10, 0
    %p128 = por %p126, %p127
    %p129 = scmp.ne.s32.totalorder %s118, %s121
    %p130 = scmp.eq.s32.totalorder %s15, 1
    %p131 = por %p129, %p130
    %p132 = scmp.ne.s32.totalorder %s121, %s122
    %p133 = scmp.eq.s32.totalorder %s15, 0
    %p134 = por %p132, %p133
    %p135 = scmp.ne.s32.totalorder %s121, %s122
    %p136 = scmp.eq.s32.totalorder %s16, 1
    %p137 = por %p135, %p136
    %p139 = scmp.ne.s32.totalorder %s122, %s138
    %p140 = scmp.eq.s32.totalorder %s16, 0
    %p141 = por %p139, %p140
    %p142 = scmp.le.s32.totalorder 1, %s10
    %p143 = scmp.lt.s32.totalorder %s10, 3
    %p144 = pnand %p142, %p143
    %p145 = pneg %p144
    // Predicated region
    $region9: #{gpt_lm_loss.1} parent=5 // pred_check
      _
    $region10: #{gpt_lm_loss.1} parent=5 // pred_check_branch
      %147 = sbr.rel (%p144) target = $region12
    $region11: #{gpt_lm_loss.1} parent=5 // pred_region
      %s148 = ssub.s32 %s10, 1
    $region12: #{gpt_lm_loss.1} parent=5 // pred_fallthru
      _
    %p149 = scmp.lt.s32.totalorder %s10, 2
    // Predicated region
    $region13: #{gpt_lm_loss.1} parent=5 // pred_check
      %p150 = pneg %p149
    $region14: #{gpt_lm_loss.1} parent=5 // pred_check_branch
      %152 = sbr.rel (%p150) target = $region16
    $region15: #{gpt_lm_loss.1} parent=5 // pred_region
      // Predicated region
      $region17: #{gpt_lm_loss.1} parent=15 // pred_check
        %p153 = pneg %p44
      $region18: #{gpt_lm_loss.1} parent=15 // pred_check_branch
        %155 = sbr.rel (%p153) target = $region20
      $region19: #{gpt_lm_loss.1} parent=15 // pred_region
        %s156 = sadd.s32 %s17, %s18
        %s157 = smul.u32 2, %s156
        %p158 = scmp.lt.s32.totalorder %s157, 3
        %s159 = scalar_select %p158, %s157, 3
        %s160 = smul.addr %s159, 8
        %s161 = scalar_lea.vmem %s0, %s160
        %s162 = sadd.s32 %s17, %s18
        %s163 = smul.u32 2, %s162
      $region20: #{gpt_lm_loss.1} parent=15 // pred_fallthru
        _
      // Predicated region
      $region21: #{gpt_lm_loss.1} parent=15 // pred_check
        %p164 = pneg %p72
      $region22: #{gpt_lm_loss.1} parent=15 // pred_check_branch
        %166 = sbr.rel (%p164) target = $region24
      $region23: #{gpt_lm_loss.1} parent=15 // pred_region
        %s167 = smul.u32 2, %s18
        %s168 = ssub.s32 1, %s167
        %s169 = smul.u32 128, %s168
        %p170 = scmp.lt.s32.totalorder %s17, 1
        %s171 = scalar_select %p170, %s17, 1
        %p172 = scmp.lt.s32.totalorder %s167, 0
        %s173 = scalar_select %p172, %s167, 0
        %s174 = sadd.s32 %s173, %s171
        %s175 = smul.addr %s174, 8
        %s176 = scalar_lea.vmem %s1, %s175
        %s177 = smul.u32 2, %s18
        %s178 = ssub.s32 1, %s177
        %s179 = smul.u32 128, %s178
      $region24: #{gpt_lm_loss.1} parent=15 // pred_fallthru
        _
    $region16: #{gpt_lm_loss.1} parent=5 // pred_fallthru
      _
    %p180 = scmp.le.s32.totalorder 1, %s10
    %p181 = scmp.lt.s32.totalorder %s10, 3
    %p182 = pnand %p180, %p181
    %p183 = pneg %p182
    // Predicated region
    $region25: #{gpt_lm_loss.1} parent=5 // pred_check
      _
    $region26: #{gpt_lm_loss.1} parent=5 // pred_check_branch
      %185 = sbr.rel (%p182) target = $region28
    $region27: #{gpt_lm_loss.1} parent=5 // pred_region
      %s186 = ssub.s32 %s10, 1
      %s187 = sadd.s32 %s19, %s20
      %s188 = smul.u32 2, %s187
      %p189 = scmp.lt.s32.totalorder %s188, 3
      %s190 = scalar_select %p189, %s188, 3
      %s191 = smul.addr %s190, 8
      %s192 = scalar_lea.vmem %s0, %s191
      %p193 = pneg %p50
      %p194 = pneg %p47
      %s195 = smul.u32 2, %s20
      %s196 = ssub.s32 1, %s195
      %s197 = smul.u32 128, %s196
      %p198 = scmp.lt.s32.totalorder %s19, 1
      %s199 = scalar_select %p198, %s19, 1
      %p200 = scmp.lt.s32.totalorder %s195, 0
      %s201 = scalar_select %p200, %s195, 0
      %s202 = sadd.s32 %s201, %s199
      %s203 = smul.addr %s202, 8
      %s204 = scalar_lea.vmem %s1, %s203
      %p205 = pneg %p78
      %p206 = pneg %p75
      %p207 = pneg %p106
      %p208 = pneg %p103
      %s209 = sadd.s32 %s19, %s20
      %s210 = smul.u32 2, %s209
      %p211 = scmp.lt.s32.totalorder %s210, 3
      %s212 = scalar_select %p211, %s210, 3
      %s213 = smul.addr %s212, 8
      %s214 = scalar_lea.vmem %s2, %s213
      %p215 = pneg %p134
      %p216 = pneg %p131
      %s217 = sadd.s32 %s19, %s20
      %s218 = smul.u32 2, %s217
      %p219 = scmp.lt.s32.totalorder %s218, 3
      %s220 = scalar_select %p219, %s218, 3
      %s221 = smul.addr %s220, 8
      %s222 = scalar_lea.vmem %s3, %s221
      %s223 = sadd.s32 %s19, %s20
      %s224 = smul.u32 2, %s223
      %p225 = scmp.lt.s32.totalorder %s224, 3
      %s226 = scalar_select %p225, %s224, 3
      %s227 = smul.addr %s226, 8
      %s228 = scalar_lea.vmem %s0, %s227
      %s229 = sadd.s32 %s19, %s20
      %s230 = smul.u32 2, %s229
      %s231 = smul.u32 2, %s20
      %s232 = ssub.s32 1, %s231
      %s233 = smul.u32 128, %s232
      %p234 = scmp.lt.s32.totalorder %s19, 1
      %s235 = scalar_select %p234, %s19, 1
      %p236 = scmp.lt.s32.totalorder %s231, 0
      %s237 = scalar_select %p236, %s231, 0
      %s238 = sadd.s32 %s237, %s235
      %s239 = smul.addr %s238, 8
      %s240 = scalar_lea.vmem %s1, %s239
      %s241 = smul.u32 2, %s20
      %s242 = ssub.s32 1, %s241
      %s243 = smul.u32 128, %s242
      %s244 = sadd.s32 %s19, %s20
      %s245 = smul.u32 2, %s244
      %p246 = scmp.lt.s32.totalorder %s245, 3
      %s247 = scalar_select %p246, %s245, 3
      %s248 = smul.addr %s247, 8
      %s249 = scalar_lea.vmem %s2, %s248
      %s250 = sadd.s32 %s19, %s20
      %s251 = smul.u32 2, %s250
      %s252 = sadd.s32 %s19, %s20
      %s253 = smul.u32 2, %s252
      %p254 = scmp.lt.s32.totalorder %s253, 3
      %s255 = scalar_select %p254, %s253, 3
      %s256 = smul.addr %s255, 8
      %s257 = scalar_lea.vmem %s3, %s256
      %s258 = sadd.s32 %s19, %s20
      %s259 = smul.u32 2, %s258
      %v260 = vld [vmem:[%s240] sm:$0xff]
      %v261 = vld [vmem:[%s240 + $0x8] sm:$0xff]
      %v262 = vld [vmem:[%s228] sm:$0xff]
      %v263 = vld [vmem:[%s228 + $0x8] sm:$0xff]
      %vm264 = vcmask 261120
      %v265 = vsel %vm264, %v260, -inf
      %266 = vmax.xlane.f32.xlu0 %v265
      %v267 = vpop.xlane.xlu0 %266
      %v268 = vsel %vm264, %v261, -inf
      %269 = vmax.xlane.f32.xlu0 %v268
      %v270 = vpop.xlane.xlu0 %269
      %v271 = vsub.f32 %v260, %v267
      %v272 = vsub.f32 %v261, %v270
      %v273 = vmul.f32 %v271, 1.442695
      %v274 = vpow.pop %v273
      %v275 = vmul.f32 %v272, 1.442695
      %v276 = vpow.pop %v275
      %v277 = vsel %vm264, %v274, 0.0
      %278 = vadd.xlane.f32.xlu0 %v277
      %v279 = vpop.xlane.xlu0 %278
      %v280 = vsel %vm264, %v276, 0.0
      %281 = vadd.xlane.f32.xlu0 %v280
      %v282 = vpop.xlane.xlu0 %281
      %v283 = vlog2.pop %v279
      %v284 = vmul.f32 %v283, 0.6931472
      %v285 = vlog2.pop %v282
      %v286 = vmul.f32 %v285, 0.6931472
      %v287 = vadd.f32 %v284, %v267
      %v288 = vadd.f32 %v286, %v270
      %v289 = vlaneseq
      %v290 = vand.u32 %v289, 127
      %291 = vset.pattern.permute.xlu0 0
      %292 = vperm.xlu0 %291, %v262
      %v293 = vpop.permute.xlu0 %292
      %294 = vset.pattern.permute.xlu0 0
      %295 = vperm.xlu0 %294, %v263
      %v296 = vpop.permute.xlu0 %295
      %vm297 = vcmp.eq.s32.totalorder %v290, %v293
      %vm298 = vcmp.eq.s32.totalorder %v290, %v296
      %v299 = vsel %vm297, %v260, 0.0
      %v300 = vsel %vm298, %v261, 0.0
      %v301 = vsel %vm264, %v299, 0.0
      %302 = vadd.xlane.f32.xlu0 %v301
      %v303 = vpop.xlane.xlu0 %302
      %v304 = vsel %vm264, %v300, 0.0
      %305 = vadd.xlane.f32.xlu0 %v304
      %v306 = vpop.xlane.xlu0 %305
      %vm307 = vcmp.ne.s32.totalorder %v262, 4294967196
      %vm308 = vcmp.ne.s32.totalorder %v263, 4294967196
      %v309 = vsub.f32 %v287, %v303
      %v310 = vsub.f32 %v288, %v306
      %v311 = vsel %vm307, %v309, 0.0
      %v312 = vsel %vm308, %v310, 0.0
      %vm313 = vcmask 7168
      %314 = vst.msk [vmem:[%s249] sm:$0xff] %vm313, %v311
      %315 = vst.msk [vmem:[%s249 + $0x8] sm:$0xff] %vm313, %v312
      %v316 = vsel %vm307, 1, 0
      %v317 = vsel %vm308, 1, 0
      %v318 = vcvt.s32.f32 %v316
      %v319 = vcvt.s32.f32 %v317
      %320 = vst.msk [vmem:[%s257] sm:$0xff] %vm313, %v318
      %321 = vst.msk [vmem:[%s257 + $0x8] sm:$0xff] %vm313, %v319
      %s322 = sadd.s32 %s19, %s20
      %s323 = smul.u32 2, %s322
      %p324 = scmp.lt.s32.totalorder %s323, 3
      %s325 = scalar_select %p324, %s323, 3
      %s326 = smul.addr %s325, 8
      %s327 = scalar_lea.vmem %s2, %s326
      %s328 = sadd.s32 %s19, %s20
      %s329 = smul.u32 2, %s328
      %p330 = scmp.lt.s32.totalorder %s329, 3
      %s331 = scalar_select %p330, %s329, 3
      %s332 = smul.addr %s331, 8
      %s333 = scalar_lea.vmem %s3, %s332
      // Predicated region
      $region29: #{gpt_lm_loss.1} parent=27 // pred_check
        %p334 = pneg %p103
      $region30: #{gpt_lm_loss.1} parent=27 // pred_check_branch
        %336 = sbr.rel (%p334) target = $region32
      $region31: #{gpt_lm_loss.1} parent=27 // pred_region
        %s337 = sadd.s32 %s19, %s20
        %s338 = smul.u32 2, %s337
      $region32: #{gpt_lm_loss.1} parent=27 // pred_fallthru
        _
      // Predicated region
      $region33: #{gpt_lm_loss.1} parent=27 // pred_check
        %p339 = pneg %p131
      $region34: #{gpt_lm_loss.1} parent=27 // pred_check_branch
        %341 = sbr.rel (%p339) target = $region36
      $region35: #{gpt_lm_loss.1} parent=27 // pred_region
        %s342 = sadd.s32 %s19, %s20
        %s343 = smul.u32 2, %s342
      $region36: #{gpt_lm_loss.1} parent=27 // pred_fallthru
        _
    $region28: #{gpt_lm_loss.1} parent=5 // pred_fallthru
      _
    %p344 = scmp.le.s32.totalorder 2, %s10
    // Predicated region
    $region37: #{gpt_lm_loss.1} parent=5 // pred_check
      %p345 = pneg %p344
    $region38: #{gpt_lm_loss.1} parent=5 // pred_check_branch
      %347 = sbr.rel (%p345) target = $region40
    $region39: #{gpt_lm_loss.1} parent=5 // pred_region
      %s348 = ssub.s32 %s10, 2
      // Predicated region
      $region41: #{gpt_lm_loss.1} parent=39 // pred_check
        %p349 = pneg %p109
      $region42: #{gpt_lm_loss.1} parent=39 // pred_check_branch
        %351 = sbr.rel (%p349) target = $region44
      $region43: #{gpt_lm_loss.1} parent=39 // pred_region
        %s352 = sadd.s32 %s21, %s22
        %s353 = smul.u32 2, %s352
        %p354 = scmp.lt.s32.totalorder %s353, 3
        %s355 = scalar_select %p354, %s353, 3
        %s356 = smul.addr %s355, 8
        %s357 = scalar_lea.vmem %s2, %s356
      $region44: #{gpt_lm_loss.1} parent=39 // pred_fallthru
        _
      // Predicated region
      $region45: #{gpt_lm_loss.1} parent=39 // pred_check
        %p358 = pneg %p137
      $region46: #{gpt_lm_loss.1} parent=39 // pred_check_branch
        %360 = sbr.rel (%p358) target = $region48
      $region47: #{gpt_lm_loss.1} parent=39 // pred_region
        %s361 = sadd.s32 %s21, %s22
        %s362 = smul.u32 2, %s361
        %p363 = scmp.lt.s32.totalorder %s362, 3
        %s364 = scalar_select %p363, %s362, 3
        %s365 = smul.addr %s364, 8
        %s366 = scalar_lea.vmem %s3, %s365
      $region48: #{gpt_lm_loss.1} parent=39 // pred_fallthru
        _
    $region40: #{gpt_lm_loss.1} parent=5 // pred_fallthru
      _
  $region6: #{gpt_lm_loss.1} parent=0 // loop_footer
    %s14 = sadd.s32 1, %s10
  $region7: #{gpt_lm_loss.1} parent=0 // loop_footer_branch
    %9 = sbr.rel target = $region3
  $region8: #{gpt_lm_loss.1} parent=0 // loop_exit
    _

</llo_original>
